<compile_context>
chip_gen: v7x
topology: tpu7x:2x2x1
jax: 0.10.0
libtpu: 0.0.40
codegen_flags: <defaults>
</compile_context>

<pallas_src>
import jax
import jax.numpy as jnp
from jax import lax
from jax.experimental import pallas as pl
from jax.experimental.pallas import tpu as pltpu


def nsp_head_kernel(x_ref, w_ref, b_ref, o_ref):
    # x: [TB, H] (VMEM, tiled over batch, pipelined)
    # w: [2, H]  (VMEM, pinned at block (0, 0) -> resident, no re-DMA)
    # b: [2]     (SMEM scalars)
    # o: [TB, 2]
    x = x_ref[...]
    w = w_ref[...]
    # Contract on H (last dim of both operands) -> [TB, 2]; f32 MXU accumulate.
    acc = lax.dot_general(
        x, w,
        dimension_numbers=(((1,), (1,)), ((), ())),
        preferred_element_type=jnp.float32,
    )
    # Bias from SMEM: select per output column (only 2 columns).
    col = lax.broadcasted_iota(jnp.int32, acc.shape, 1)
    acc = acc + jnp.where(col == 0, b_ref[0], b_ref[1])
    o_ref[...] = acc.astype(o_ref.dtype)


def bert_only_nsp_head(pooled_output, weight, bias, *, block_b=1024):
    """Forward of BertOnlyNSPHead: pooled_output @ weight.T + bias.

    pooled_output: [B, H]  (f32 or bf16; matmul accumulates in f32 either way)
    weight:        [2, H]  (PyTorch nn.Linear layout, kept lane-dense)
    bias:          [2]
    returns:       [B, 2]
    """
    B, H = pooled_output.shape
    assert weight.shape == (2, H)
    assert bias.shape == (2,)

    itemsize = jnp.dtype(pooled_output.dtype).itemsize

    # Size the batch tile so one x buffer is ~4 MiB (double-buffered -> ~8 MiB),
    # capped by block_b and B.  Keep it a multiple of 8 (sublane) unless the
    # tile covers the whole (possibly ragged) batch, in which case the block
    # shape equals the full array dim and the (8, 128) rule does not apply.
    target_rows = max(8, (4 * 1024 * 1024) // max(1, H * itemsize))
    tb = min(block_b, B, target_rows)
    if tb < B:
        tb = max(8, (tb // 8) * 8)
    grid = (pl.cdiv(B, tb),)

    cost = pl.CostEstimate(
        flops=2 * B * H * 2,
        transcendentals=0,
        bytes_accessed=(
            B * H * itemsize
            + 2 * H * jnp.dtype(weight.dtype).itemsize
            + B * 2 * itemsize
            + 2 * jnp.dtype(bias.dtype).itemsize
        ),
    )

    return pl.pallas_call(
        nsp_head_kernel,
        out_shape=jax.ShapeDtypeStruct((B, 2), pooled_output.dtype),
        grid=grid,
        in_specs=[
            # x: tiled over batch, double-buffered across the grid.
            pl.BlockSpec((tb, H), lambda i: (i, 0)),
            # weight: same block every step -> resident in VMEM.
            pl.BlockSpec((2, H), lambda i: (0, 0)),
            # bias: whole (2,) array as SMEM scalars.
            pl.BlockSpec(memory_space=pltpu.MemorySpace.SMEM),
        ],
        out_specs=pl.BlockSpec((tb, 2), lambda i: (i, 0)),
        compiler_params=pltpu.CompilerParams(
            # Batch tiles are independent -> allow dual-TC sharding on v7x.
            dimension_semantics=("parallel",),
        ),
        cost_estimate=cost,
    )(pooled_output, weight, bias)


if __name__ == "__main__":
    batch, hidden = 8, 32

    key = jax.random.PRNGKey(0)
    k_x, k_w, k_b = jax.random.split(key, 3)

    pooled_output = jax.random.normal(k_x, (batch, hidden), dtype=jnp.float32)
    # Deterministic "Linear(hidden, 2)" params (synthetic init, not a checkpoint).
    weight = jax.random.normal(k_w, (2, hidden), dtype=jnp.float32) * 0.02
    bias = jax.random.normal(k_b, (2,), dtype=jnp.float32) * 0.02

    out = bert_only_nsp_head(pooled_output, weight, bias)
    out = jax.block_until_ready(out)

    # Reference check against plain JAX linear.
    ref = pooled_output @ weight.T + bias
    assert out.shape == (batch, 2)
    assert jnp.allclose(out, ref, atol=1e-5, rtol=1e-5)

    print("KERNEL_OK")
</pallas_src>

<mosaic_0001>
module attributes {stable_mosaic.version = 11 : i64} {
  func.func @nsp_head_kernel(%arg0: i32, %arg1: memref<8x32xf32, #tpu.memory_space<vmem>>, %arg2: memref<2x32xf32, #tpu.memory_space<vmem>>, %arg3: memref<2xf32, #tpu.memory_space<smem>>, %arg4: memref<8x2xf32, #tpu.memory_space<vmem>>) attributes {dimension_semantics = [#tpu.dimension_semantics<parallel>], iteration_bounds = array<i64: 1>, scalar_prefetch = 0 : i64, scratch_operands = 0 : i64, tpu.core_type = #tpu.core_type<tc>, window_params = [{transform_indices = @transform_0, window_bounds = array<i64: 8, 32>}, {pipeline_mode = #tpu.pipeline_mode<synchronous>, transform_indices = @transform_1, window_bounds = array<i64: 2, 32>}, {transform_indices = @transform_2, window_bounds = array<i64: 2>}, {transform_indices = @transform_3, window_bounds = array<i64: 8, 2>}]} {
    %c0 = arith.constant 0 : index
    %c0_0 = arith.constant 0 : index
    %0 = vector.load %arg1[%c0, %c0_0] : memref<8x32xf32, #tpu.memory_space<vmem>>, vector<8x32xf32>
    %c0_1 = arith.constant 0 : index
    %c0_2 = arith.constant 0 : index
    %1 = vector.load %arg2[%c0_1, %c0_2] : memref<2x32xf32, #tpu.memory_space<vmem>>, vector<2x32xf32>
    %cst = arith.constant dense<0.000000e+00> : vector<8x2xf32>
    %2 = tpu.matmul %0, %1, %cst {dimension_numbers = #tpu.dot_dimension_numbers<[1], [1], [0], [0], [0, 0, 1, 0], [], []>} : vector<8x32xf32>, vector<2x32xf32>, vector<8x2xf32> -> vector<8x2xf32>
    %3 = tpu.iota {dimensions = array<i32: 1>} : vector<8x2xi32>
    %c0_i32 = arith.constant 0 : i32
    %4 = vector.broadcast %c0_i32 : i32 to vector<8x2xi32>
    %5 = arith.cmpi eq, %3, %4 : vector<8x2xi32>
    %c0_3 = arith.constant 0 : index
    %6 = memref.load %arg3[%c0_3] : memref<2xf32, #tpu.memory_space<smem>>
    %c1 = arith.constant 1 : index
    %7 = memref.load %arg3[%c1] : memref<2xf32, #tpu.memory_space<smem>>
    %8 = vector.broadcast %6 : f32 to vector<8x2xf32>
    %9 = vector.broadcast %7 : f32 to vector<8x2xf32>
    %10 = arith.select %5, %8, %9 : vector<8x2xi1>, vector<8x2xf32>
    %11 = arith.addf %2, %10 : vector<8x2xf32>
    %c0_4 = arith.constant 0 : index
    %c0_5 = arith.constant 0 : index
    %12 = vector.load %arg4[%c0_4, %c0_5] : memref<8x2xf32, #tpu.memory_space<vmem>>, vector<8x2xf32>
    tpu.vector_store %arg4[%c0_4, %c0_5], %11 {strides = array<i32>} : memref<8x2xf32, #tpu.memory_space<vmem>>, vector<8x2xf32>,
    return
  }
  func.func @transform_0(%arg0: i32) -> (i32, i32) {
    %c0_i32 = arith.constant 0 : i32
    %c0_i32_0 = arith.constant 0 : i32
    return %arg0, %c0_i32 : i32, i32
  }
  func.func @transform_1(%arg0: i32) -> (i32, i32) {
    %c0_i32 = arith.constant 0 : i32
    %c0_i32_0 = arith.constant 0 : i32
    %c0_i32_1 = arith.constant 0 : i32
    return %c0_i32, %c0_i32_0 : i32, i32
  }
  func.func @transform_2(%arg0: i32) -> i32 {
    %c0_i32 = arith.constant 0 : i32
    %c0_i32_0 = arith.constant 0 : i32
    return %c0_i32 : i32
  }
  func.func @transform_3(%arg0: i32) -> (i32, i32) {
    %c0_i32 = arith.constant 0 : i32
    %c0_i32_0 = arith.constant 0 : i32
    return %arg0, %c0_i32 : i32, i32
  }
}

</mosaic_0001>

<llo_original>
// kernel: tpu_custom_call.1
$region0: #{tpu_custom_call.1}
  #allocation0 [shape = 'u32[]', space=smem, size = 0x4, offset = 0x4, fixed_abs, tag = 'smem constant byte address 0x4 - core index']
  #allocation1 [shape = 'u32[144,128]{1,0:T(1,128)}', space=vmem, size = 0x12000, scoped, tag = 'internal scratch']
  %s0 = inlined_call_operand.hbm [shape: f32[8,32], index: 0, kind: input, shape index: {}]
  %s1 = inlined_call_operand.vmem [shape: f32[2,32], index: 1, kind: input, shape index: {}]
  %s2 = inlined_call_operand.vmem [shape: f32[2], index: 2, kind: input, shape index: {}]
  %s3 = inlined_call_operand.vmem [shape: f32[8,2], index: 3, kind: output, shape index: {}]
  %s4 = sld [smem:[#allocation0]]
  $region30: #{tpu_custom_call.1} parent=0
    _
  %s6 = ssub.s32 1, %s4
  %s7 = scalar_select 0, %s6, %s4
  $region1: #{tpu_custom_call.1} parent=0
    #allocation2 [shape = 'u8[4096]{0}', space=vmem, size = 0x1000, scoped, tag = 'input window, operand 0, single buffered']
    #allocation3 [shape = 's32[1]{0}', space=sflag, size = 0x4, scoped, tag = 'scoped memory for tpu_custom_call.1']
    #allocation4 [shape = 's32[1]{0}', space=sflag, size = 0x4, scoped, tag = 'scoped memory for tpu_custom_call.1']
    #allocation5 [shape = 'u8[512]{0}', space=smem, size = 0x200, scoped, tag = 'input window, operand 2, single buffered']
    %8 = vsyncpa [#allocation3], 0
    %9 = vsyncpa [#allocation4], 0
    // Predicated region
    $region2: #{tpu_custom_call.1} parent=1 // pred_check
      _
    $region3: #{tpu_custom_call.1} parent=1 // pred_check_branch
      %11 = sbr.rel (0) target = $region5
    $region4: #{tpu_custom_call.1} parent=1 // pred_region
      %s13 = ssub.s32 128, 128
      %14 = vsyncadd [#allocation3], %s13
      %s16 = sshll.u32 [#allocation2], 4
      %s17 = int_to_ptr.vmem [resolvable:$true] %s16
      %19 = dma.hbm_to_vmem [thread:$0]  %s0, 128, %s17, [#allocation3]
    $region5: #{tpu_custom_call.1} parent=1 // pred_fallthru
      _
    // Predicated region
    $region6: #{tpu_custom_call.1} parent=1 // pred_check
      _
    $region7: #{tpu_custom_call.1} parent=1 // pred_check_branch
      %21 = sbr.rel (0) target = $region9
    $region8: #{tpu_custom_call.1} parent=1 // pred_region
      _
    $region9: #{tpu_custom_call.1} parent=1 // pred_fallthru
      _
    // Predicated region
    $region10: #{tpu_custom_call.1} parent=1 // pred_check
      _
    $region11: #{tpu_custom_call.1} parent=1 // pred_check_branch
      %23 = sbr.rel (0) target = $region13
    $region12: #{tpu_custom_call.1} parent=1 // pred_region
      %s25 = ssub.s32 16, 16
      %26 = vsyncadd [#allocation4], %s25
      %s28 = sshll.u32 %s2, 4
      %s29 = int_to_ptr.vmem [resolvable:$true] %s28
      %31 = dma.vmem_to_smem %s29, 16, [#allocation5], [#allocation4]
    $region13: #{tpu_custom_call.1} parent=1 // pred_fallthru
      _
    // Predicated region
    $region14: #{tpu_custom_call.1} parent=1 // pred_check
      _
    $region15: #{tpu_custom_call.1} parent=1 // pred_check_branch
      %33 = sbr.rel (0) target = $region17
    $region16: #{tpu_custom_call.1} parent=1 // pred_region
      %34 = dma.done [#allocation3], 128
    $region17: #{tpu_custom_call.1} parent=1 // pred_fallthru
      _
    // Predicated region
    $region18: #{tpu_custom_call.1} parent=1 // pred_check
      _
    $region19: #{tpu_custom_call.1} parent=1 // pred_check_branch
      %36 = sbr.rel (0) target = $region21
    $region20: #{tpu_custom_call.1} parent=1 // pred_region
      %37 = dma.done [#allocation4], 16
    $region21: #{tpu_custom_call.1} parent=1 // pred_fallthru
      _
    %38 = sfence
    %v39 = vld [vmem:[#allocation2] sm:$0xff]
    %v40 = vld [vmem:[%s1] sm:$0x3]
    %v41 = vlaneseq
    %v42 = vand.u32 %v41, 127
    %vm43 = vcmp.eq.s32.totalorder %v42, 0
    %s44 = sld [smem:[#allocation5]]
    %s45 = sld [smem:[#allocation5 + $0x1]]
    %v46 = vstv %s44
    %v47 = vstv %s45
    %v48 = vsel %vm43, %v46, %v47
    %vm49 = vcmask 261120
    %v51 = vsel %vm49, %v39, 0
    %v54 = vsel %vm49, %v40, 0
    %56 = vmatprep.subr.mxu0 0.0
    %57 = vmatpush1.xpose.msra.mxu0 %v54
    %58 = vmatprep.subr.mxu0 0.0
    %59 = vmatpush1.xpose.msra.mxu0 0.0
    %60 = vmatprep.subr.mxu0 0.0
    %61 = vmatpush1.xpose.msra.mxu0 0.0
    %62 = vmatprep.subr.mxu0 0.0
    %63 = vmatpush1.xpose.msra.mxu0 0.0
    %64 = vmatprep.subr.mxu0 0.0
    %65 = vmatpush1.xpose.msra.mxu0 0.0
    %66 = vmatprep.subr.mxu0 0.0
    %67 = vmatpush1.xpose.msra.mxu0 0.0
    %68 = vmatprep.subr.mxu0 0.0
    %69 = vmatpush1.xpose.msra.mxu0 0.0
    %70 = vmatprep.subr.mxu0 0.0
    %71 = vmatpush1.xpose.msra.mxu0 0.0
    %72 = vmatprep.subr.mxu0 0.0
    %73 = vmatpush1.xpose.msra.mxu0 0.0
    %74 = vmatprep.subr.mxu0 0.0
    %75 = vmatpush1.xpose.msra.mxu0 0.0
    %76 = vmatprep.subr.mxu0 0.0
    %77 = vmatpush1.xpose.msra.mxu0 0.0
    %78 = vmatprep.subr.mxu0 0.0
    %79 = vmatpush1.xpose.msra.mxu0 0.0
    %80 = vmatprep.subr.mxu0 0.0
    %81 = vmatpush1.xpose.msra.mxu0 0.0
    %82 = vmatprep.subr.mxu0 0.0
    %83 = vmatpush1.xpose.msra.mxu0 0.0
    %84 = vmatprep.subr.mxu0 0.0
    %85 = vmatpush1.xpose.msra.mxu0 0.0
    %86 = vmatprep.subr.mxu0 0.0
    %87 = vmatpush1.xpose.msra.mxu0 0.0
    %88 = vmatprep.subr.mxu0 0.0
    %89 = vmatpush1.xpose.msra.mxu0 0.0
    %90 = vmatprep.subr.mxu0 0.0
    %91 = vmatpush1.xpose.msra.mxu0 0.0
    %92 = vmatprep.subr.mxu0 0.0
    %93 = vmatpush1.xpose.msra.mxu0 0.0
    %94 = vmatprep.subr.mxu0 0.0
    %95 = vmatpush1.xpose.msra.mxu0 0.0
    %96 = vmatprep.subr.mxu0 0.0
    %97 = vmatpush1.xpose.msra.mxu0 0.0
    %98 = vmatprep.subr.mxu0 0.0
    %99 = vmatpush1.xpose.msra.mxu0 0.0
    %100 = vmatprep.subr.mxu0 0.0
    %101 = vmatpush1.xpose.msra.mxu0 0.0
    %102 = vmatprep.subr.mxu0 0.0
    %103 = vmatpush1.xpose.msra.mxu0 0.0
    %104 = vmatprep.subr.mxu0 0.0
    %105 = vmatpush1.xpose.msra.mxu0 0.0
    %106 = vmatprep.subr.mxu0 0.0
    %107 = vmatpush1.xpose.msra.mxu0 0.0
    %108 = vmatprep.subr.mxu0 0.0
    %109 = vmatpush1.xpose.msra.mxu0 0.0
    %110 = vmatprep.subr.mxu0 0.0
    %111 = vmatpush1.xpose.msra.mxu0 0.0
    %112 = vmatprep.subr.mxu0 0.0
    %113 = vmatpush1.xpose.msra.mxu0 0.0
    %114 = vmatprep.subr.mxu0 0.0
    %115 = vmatpush1.xpose.msra.mxu0 0.0
    %116 = vmatprep.subr.mxu0 0.0
    %117 = vmatpush1.xpose.msra.mxu0 0.0
    %118 = vmatprep.subr.mxu0 0.0
    %119 = vmatpush1.xpose.msra.mxu0 0.0
    %120 = vmatprep.mubr.f32.mxu0 0.0
    %121 = vmatmul.mubr.f32.gmra.mrb[0].mxu0 %v51
    %v122 = vpop.f32.mrb[0].mxu0
    %v123 = vadd.f32 %v48, %v122
    %v124 = vpop.f32.mrb[0].mxu0
    %125 = vdwg.mxu0
    %vm126 = vcmask 15360
    %127 = vst.msk [vmem:[%s3] sm:$0xff] %vm126, %v123
    // Predicated region
    $region22: #{tpu_custom_call.1} parent=1 // pred_check
      _
    $region23: #{tpu_custom_call.1} parent=1 // pred_check_branch
      %129 = sbr.rel (0) target = $region25
    $region24: #{tpu_custom_call.1} parent=1 // pred_region
      _
    $region25: #{tpu_custom_call.1} parent=1 // pred_fallthru
      _
    // Predicated region
    $region26: #{tpu_custom_call.1} parent=1 // pred_check
      _
    $region27: #{tpu_custom_call.1} parent=1 // pred_check_branch
      %131 = sbr.rel (0) target = $region29
    $region28: #{tpu_custom_call.1} parent=1 // pred_region
      _
    $region29: #{tpu_custom_call.1} parent=1 // pred_fallthru
      _
    %132 = vsyncpa [#allocation3], 1
    %133 = vsyncpa [#allocation4], 1

</llo_original>
